<compile_context>
chip_gen: v5e
topology: v5e:2x2
jax: 0.10.0
libtpu: 0.0.40
codegen_flags: <defaults>
</compile_context>

<pallas_src>
import jax
import jax.numpy as jnp
from jax import lax
from jax.experimental import pallas as pl
from jax.experimental.pallas import tpu as pltpu


def _make_kernel(n_rows):
    """Kernel closure; n_rows (true batch size) is static at trace time."""

    def kernel(logits_ref, targets_ref, wper_ref, loss_part_ref, w_part_ref):
        i = pl.program_id(0)

        logits = logits_ref[...].astype(jnp.float32)   # (tn, C), cast in-kernel
        targets = targets_ref[...]                     # (tn, 1) int32
        w_per = wper_ref[...]                          # (tn, 1) f32 = class_weights[y]

        tn, c = logits.shape

        # Validity mask for the last (possibly overhanging) tile.
        row = lax.broadcasted_iota(jnp.int32, (tn, 1), 0) + i * tn
        valid = row < n_rows

        # Numerically-stable logsumexp over the class axis (exp/log on EUP).
        m = jnp.max(logits, axis=-1, keepdims=True)                         # (tn, 1)
        lse = m + jnp.log(jnp.sum(jnp.exp(logits - m), axis=-1, keepdims=True))

        # Target logit via select+reduce (no one-hot / log-softmax temporaries).
        col = lax.broadcasted_iota(jnp.int32, (tn, c), 1)
        tgt = jnp.sum(jnp.where(col == targets, logits, 0.0),
                      axis=-1, keepdims=True)                               # (tn, 1)
        nll = lse - tgt                                                     # (tn, 1)

        # Mask overhang rows; the where-select also stops NaN/Inf from the
        # unspecified overhang data propagating into the partial sums.
        contrib = jnp.where(valid, w_per * nll, 0.0)
        w_eff = jnp.where(valid, w_per, 0.0)

        loss_tile = jnp.sum(contrib, keepdims=True)    # (1, 1)
        w_tile = jnp.sum(w_eff, keepdims=True)         # (1, 1)

        # Lane-dense splat -> unmasked vector store; wrapper reads [:, 0, 0].
        loss_part_ref[...] = jnp.broadcast_to(loss_tile[None], loss_part_ref.shape)
        w_part_ref[...] = jnp.broadcast_to(w_tile[None], w_part_ref.shape)

    return kernel


def _generation_budget():
    """Returns (vmem_limit_bytes, max_block_bytes) per TPU generation."""
    try:
        kind = jax.devices()[0].device_kind.lower()
    except Exception:
        kind = ""
    if "v7" in kind:
        return 48 * 1024 * 1024, 10 * 1024 * 1024   # 64 MiB physical VMEM
    if "v5" in kind or "v6" in kind:
        return 96 * 1024 * 1024, 16 * 1024 * 1024   # 128 MiB physical VMEM
    return 48 * 1024 * 1024, 8 * 1024 * 1024        # unknown: safe everywhere


def weighted_cross_entropy(outputs, targets, class_weights=None, *, block_rows=None):
    """outputs: (N, C) logits (any float dtype); targets: (N,) int; class_weights: (C,) or None."""
    n, c = outputs.shape
    itemsize = jnp.dtype(outputs.dtype).itemsize

    vmem_limit, max_block_bytes = _generation_budget()

    # Sublane packing minimum: f32 -> 8 rows, bf16 -> 16, int8/fp8 -> 32.
    pack = max(8, 32 // max(itemsize, 1))

    if block_rows is None:
        block_rows = max_block_bytes // max(c * itemsize, 1)
    block_rows = int(max(pack, min(block_rows, 32768)))
    block_rows -= block_rows % pack

    n_round = -(-n // pack) * pack
    tn = min(block_rows, n_round)
    num_tiles = -(-n // tn)
    n_pad = num_tiles * tn                  # pad only the tiny per-sample vectors

    targets_i32 = jnp.asarray(targets, dtype=jnp.int32)
    if class_weights is None:               # module's class_weights=None branch
        w_per = jnp.where(targets_i32 >= 0, 1.0, 0.0).astype(jnp.float32)
    else:
        cw = jnp.asarray(class_weights, dtype=jnp.float32)
        safe_t = jnp.clip(targets_i32, 0, c - 1)
        w_per = jnp.where((targets_i32 >= 0) & (targets_i32 < c),
                          cw[safe_t], 0.0).astype(jnp.float32)
        # TODO(synk): targets >= C contribute zero here instead of raising like PyTorch.

    targets_2d = targets_i32.reshape(n, 1)
    w_per_2d = w_per.reshape(n, 1)
    if n_pad != n:
        # Only the small (N, 1) side inputs are padded; the (N, C) logits stream
        # is NOT copied -- the overhanging last tile is masked in-kernel.
        targets_2d = jnp.pad(targets_2d, ((0, n_pad - n), (0, 0)), constant_values=-1)
        w_per_2d = jnp.pad(w_per_2d, ((0, n_pad - n), (0, 0)))

    cost = pl.CostEstimate(
        flops=7 * n * c,
        transcendentals=n * c + n,
        bytes_accessed=n * c * itemsize + n_pad * 8 + num_tiles * 8 * 128 * 4 * 2,
    )

    part_shape = (num_tiles, 8, 128)
    loss_parts, w_parts = pl.pallas_call(
        _make_kernel(n),
        out_shape=(jax.ShapeDtypeStruct(part_shape, jnp.float32),
                   jax.ShapeDtypeStruct(part_shape, jnp.float32)),
        grid_spec=pltpu.PrefetchScalarGridSpec(
            num_scalar_prefetch=0,
            grid=(num_tiles,),
            in_specs=[
                pl.BlockSpec((tn, c), lambda i: (i, 0)),   # logits stream (native dtype)
                pl.BlockSpec((tn, 1), lambda i: (i, 0)),   # targets
                pl.BlockSpec((tn, 1), lambda i: (i, 0)),   # per-sample class weight
            ],
            out_specs=[
                pl.BlockSpec((1, 8, 128), lambda i: (i, 0, 0)),   # per-tile sum(w*nll)
                pl.BlockSpec((1, 8, 128), lambda i: (i, 0, 0)),   # per-tile sum(w)
            ],
        ),
        compiler_params=pltpu.CompilerParams(
            dimension_semantics=("parallel",),   # tiles independent -> v7x 2-TC sharding
            vmem_limit_bytes=vmem_limit,
        ),
        cost_estimate=cost,
    )(outputs, targets_2d, w_per_2d)

    # Tiny final reduce in XLA.  PyTorch CrossEntropyLoss(weight=w) 'mean':
    # sum_i w[y_i] * nll_i / sum_i w[y_i]   (NaN when sum(w) == 0, same as PyTorch).
    return jnp.sum(loss_parts[:, 0, 0]) / jnp.sum(w_parts[:, 0, 0])


class WeightedLoss:
    """JAX/Pallas equivalent of the PyTorch WeightedLoss module (forward only)."""

    def __init__(self, class_weights, device=None):
        del device
        self.class_weights = (None if class_weights is None
                              else jnp.asarray(class_weights, dtype=jnp.float32))

    def __call__(self, outputs, targets):
        return weighted_cross_entropy(outputs, targets, self.class_weights)


if __name__ == "__main__":
    key = jax.random.PRNGKey(0)
    k1, k2 = jax.random.split(key)

    N, C = 12, 4  # small; N % 8 != 0 exercises the in-kernel overhang mask
    outputs = jax.random.normal(k1, (N, C), dtype=jnp.float32)
    targets = jax.random.randint(k2, (N,), 0, C, dtype=jnp.int32)
    class_weights = jnp.array([1.0, 2.0, 0.5, 1.5], dtype=jnp.float32)

    # weighted path, forced onto two tiles (last tile overhangs the batch)
    loss_w = weighted_cross_entropy(outputs, targets, class_weights, block_rows=8)
    # unweighted path (class_weights=None branch), default block sizing
    loss_u = weighted_cross_entropy(outputs, targets, None)
    # bf16 logits streamed in native dtype, cast to f32 inside the kernel
    loss_b = weighted_cross_entropy(outputs.astype(jnp.bfloat16), targets, class_weights)
    # module-style wrapper
    loss_m = WeightedLoss(class_weights)(outputs, targets)
    jax.block_until_ready((loss_w, loss_u, loss_b, loss_m))

    def ref_loss(logits_f32, tgts, w=None):
        logp = jax.nn.log_softmax(logits_f32, axis=-1)
        nll = -logp[jnp.arange(tgts.shape[0]), tgts]
        if w is None:
            return jnp.mean(nll)
        wp = w[tgts]
        return jnp.sum(wp * nll) / jnp.sum(wp)

    ref_w = ref_loss(outputs, targets, class_weights)
    ref_u = ref_loss(outputs, targets, None)
    ref_b = ref_loss(outputs.astype(jnp.bfloat16).astype(jnp.float32), targets, class_weights)

    assert jnp.allclose(loss_w, ref_w, atol=1e-5, rtol=1e-5), (loss_w, ref_w)
    assert jnp.allclose(loss_u, ref_u, atol=1e-5, rtol=1e-5), (loss_u, ref_u)
    assert jnp.allclose(loss_b, ref_b, atol=1e-4, rtol=1e-4), (loss_b, ref_b)
    assert jnp.allclose(loss_m, ref_w, atol=1e-5, rtol=1e-5), (loss_m, ref_w)

    print("KERNEL_OK")
</pallas_src>

<mosaic_0001>
module attributes {stable_mosaic.version = 11 : i64} {
  func.func @kernel(%arg0: i32, %arg1: memref<8x4xf32, #tpu.memory_space<vmem>>, %arg2: memref<8x1xi32, #tpu.memory_space<vmem>>, %arg3: memref<8x1xf32, #tpu.memory_space<vmem>>, %arg4: memref<1x8x128xf32, #tpu.memory_space<vmem>>, %arg5: memref<1x8x128xf32, #tpu.memory_space<vmem>>) attributes {dimension_semantics = [#tpu.dimension_semantics<parallel>], iteration_bounds = array<i64: 2>, scalar_prefetch = 0 : i64, scratch_operands = 0 : i64, tpu.core_type = #tpu.core_type<tc>, window_params = [{transform_indices = @transform_0, window_bounds = array<i64: 8, 4>}, {transform_indices = @transform_1, window_bounds = array<i64: 8, 1>}, {transform_indices = @transform_2, window_bounds = array<i64: 8, 1>}, {transform_indices = @transform_3, window_bounds = array<i64: 1, 8, 128>}, {transform_indices = @transform_4, window_bounds = array<i64: 1, 8, 128>}]} {
    %c0 = arith.constant 0 : index
    %c0_0 = arith.constant 0 : index
    %0 = vector.load %arg1[%c0, %c0_0] : memref<8x4xf32, #tpu.memory_space<vmem>>, vector<8x4xf32>
    %c0_1 = arith.constant 0 : index
    %c0_2 = arith.constant 0 : index
    %1 = vector.load %arg2[%c0_1, %c0_2] : memref<8x1xi32, #tpu.memory_space<vmem>>, vector<8x1xi32>
    %c0_3 = arith.constant 0 : index
    %c0_4 = arith.constant 0 : index
    %2 = vector.load %arg3[%c0_3, %c0_4] : memref<8x1xf32, #tpu.memory_space<vmem>>, vector<8x1xf32>
    %3 = tpu.iota {dimensions = array<i32: 0>} : vector<8x1xi32>
    %c8_i32 = arith.constant 8 : i32
    %4 = arith.muli %arg0, %c8_i32 : i32
    %5 = vector.broadcast %4 : i32 to vector<8x1xi32>
    %6 = arith.addi %3, %5 : vector<8x1xi32>
    %c12_i32 = arith.constant 12 : i32
    %7 = vector.broadcast %c12_i32 : i32 to vector<8x1xi32>
    %8 = arith.cmpi slt, %6, %7 : vector<8x1xi32>
    %cst = arith.constant dense<0xFF800000> : vector<8xf32>
    %9 = vector.multi_reduction <maximumf>, %0, %cst [1] : vector<8x4xf32> to vector<8xf32>
    %10 = vector.shape_cast %9 : vector<8xf32> to vector<8x1xf32>
    %11 = vector.broadcast %10 : vector<8x1xf32> to vector<8x4xf32>
    %12 = arith.subf %0, %11 : vector<8x4xf32>
    %13 = math.exp %12 : vector<8x4xf32>
    %cst_5 = arith.constant dense<0.000000e+00> : vector<8xf32>
    %14 = vector.multi_reduction <add>, %13, %cst_5 [1] : vector<8x4xf32> to vector<8xf32>
    %15 = vector.shape_cast %14 : vector<8xf32> to vector<8x1xf32>
    %16 = math.log %15 : vector<8x1xf32>
    %17 = arith.addf %10, %16 : vector<8x1xf32>
    %18 = tpu.iota {dimensions = array<i32: 1>} : vector<8x4xi32>
    %19 = vector.broadcast %1 : vector<8x1xi32> to vector<8x4xi32>
    %20 = arith.cmpi eq, %18, %19 : vector<8x4xi32>
    %cst_6 = arith.constant 0.000000e+00 : f32
    %21 = vector.broadcast %cst_6 : f32 to vector<8x4xf32>
    %22 = arith.select %20, %0, %21 : vector<8x4xi1>, vector<8x4xf32>
    %cst_7 = arith.constant dense<0.000000e+00> : vector<8xf32>
    %23 = vector.multi_reduction <add>, %22, %cst_7 [1] : vector<8x4xf32> to vector<8xf32>
    %24 = vector.shape_cast %23 : vector<8xf32> to vector<8x1xf32>
    %25 = arith.subf %17, %24 : vector<8x1xf32>
    %26 = arith.mulf %2, %25 : vector<8x1xf32>
    %cst_8 = arith.constant 0.000000e+00 : f32
    %27 = vector.broadcast %cst_8 : f32 to vector<8x1xf32>
    %28 = arith.select %8, %26, %27 : vector<8x1xi1>, vector<8x1xf32>
    %cst_9 = arith.constant 0.000000e+00 : f32
    %29 = vector.broadcast %cst_9 : f32 to vector<8x1xf32>
    %30 = arith.select %8, %2, %29 : vector<8x1xi1>, vector<8x1xf32>
    %31 = vector.shape_cast %28 : vector<8x1xf32> to vector<1x8x1xf32>
    %cst_10 = arith.constant dense<0.000000e+00> : vector<1xf32>
    %32 = vector.multi_reduction <add>, %31, %cst_10 [1, 2] : vector<1x8x1xf32> to vector<1xf32>
    %33 = vector.shape_cast %32 : vector<1xf32> to vector<1x1x1xf32>
    %34 = vector.extract %33[0, 0, 0] : f32 from vector<1x1x1xf32>
    %35 = vector.broadcast %34 : f32 to vector<1x1xf32>
    %36 = vector.shape_cast %30 : vector<8x1xf32> to vector<1x8x1xf32>
    %cst_11 = arith.constant dense<0.000000e+00> : vector<1xf32>
    %37 = vector.multi_reduction <add>, %36, %cst_11 [1, 2] : vector<1x8x1xf32> to vector<1xf32>
    %38 = vector.shape_cast %37 : vector<1xf32> to vector<1x1x1xf32>
    %39 = vector.extract %38[0, 0, 0] : f32 from vector<1x1x1xf32>
    %40 = vector.broadcast %39 : f32 to vector<1x1xf32>
    %41 = vector.shape_cast %35 : vector<1x1xf32> to vector<1x1x1xf32>
    %42 = vector.shape_cast %41 : vector<1x1x1xf32> to vector<1x1x1xf32>
    %43 = vector.broadcast %42 : vector<1x1x1xf32> to vector<1x8x128xf32>
    %c0_12 = arith.constant 0 : index
    %c0_13 = arith.constant 0 : index
    %c0_14 = arith.constant 0 : index
    %44 = vector.load %arg4[%c0_12, %c0_13, %c0_14] : memref<1x8x128xf32, #tpu.memory_space<vmem>>, vector<1x8x128xf32>
    tpu.vector_store %arg4[%c0_12, %c0_13, %c0_14], %43 {strides = array<i32>} : memref<1x8x128xf32, #tpu.memory_space<vmem>>, vector<1x8x128xf32>,
    %45 = vector.shape_cast %40 : vector<1x1xf32> to vector<1x1x1xf32>
    %46 = vector.shape_cast %45 : vector<1x1x1xf32> to vector<1x1x1xf32>
    %47 = vector.broadcast %46 : vector<1x1x1xf32> to vector<1x8x128xf32>
    %c0_15 = arith.constant 0 : index
    %c0_16 = arith.constant 0 : index
    %c0_17 = arith.constant 0 : index
    %48 = vector.load %arg5[%c0_15, %c0_16, %c0_17] : memref<1x8x128xf32, #tpu.memory_space<vmem>>, vector<1x8x128xf32>
    tpu.vector_store %arg5[%c0_15, %c0_16, %c0_17], %47 {strides = array<i32>} : memref<1x8x128xf32, #tpu.memory_space<vmem>>, vector<1x8x128xf32>,
    return
  }
  func.func @transform_0(%arg0: i32) -> (i32, i32) {
    %c0_i32 = arith.constant 0 : i32
    %c0_i32_0 = arith.constant 0 : i32
    return %arg0, %c0_i32 : i32, i32
  }
  func.func @transform_1(%arg0: i32) -> (i32, i32) {
    %c0_i32 = arith.constant 0 : i32
    %c0_i32_0 = arith.constant 0 : i32
    return %arg0, %c0_i32 : i32, i32
  }
  func.func @transform_2(%arg0: i32) -> (i32, i32) {
    %c0_i32 = arith.constant 0 : i32
    %c0_i32_0 = arith.constant 0 : i32
    return %arg0, %c0_i32 : i32, i32
  }
  func.func @transform_3(%arg0: i32) -> (i32, i32, i32) {
    %c0_i32 = arith.constant 0 : i32
    %c0_i32_0 = arith.constant 0 : i32
    %c0_i32_1 = arith.constant 0 : i32
    return %arg0, %c0_i32, %c0_i32_0 : i32, i32, i32
  }
  func.func @transform_4(%arg0: i32) -> (i32, i32, i32) {
    %c0_i32 = arith.constant 0 : i32
    %c0_i32_0 = arith.constant 0 : i32
    %c0_i32_1 = arith.constant 0 : i32
    return %arg0, %c0_i32, %c0_i32_0 : i32, i32, i32
  }
}

</mosaic_0001>

<llo_original>
// kernel: tpu_custom_call.1
$region0: #{tpu_custom_call.1}
  #allocation0 [shape = 'u32[]', space=smem, size = 0x4, offset = 0x4, fixed_abs, tag = 'smem constant byte address 0x4 - core index']
  #allocation1 [shape = 'u32[72,128]{1,0:T(1,128)}', space=vmem, size = 0x9000, scoped, tag = 'internal scratch']
  %s0 = inlined_call_operand.vmem [shape: f32[12,4], index: 0, kind: input, shape index: {}]
  %s1 = inlined_call_operand.vmem [shape: s32[16,1], index: 1, kind: input, shape index: {}]
  %s2 = inlined_call_operand.vmem [shape: f32[16,1], index: 2, kind: input, shape index: {}]
  %s3 = inlined_call_operand.hbm [shape: f32[2,8,128], index: 3, kind: output, shape index: {0}]
  %s4 = inlined_call_operand.hbm [shape: f32[2,8,128], index: 4, kind: output, shape index: {1}]
  %5 = xla_tuple %s3, %s4
  %s6 = sld [smem:[#allocation0]]
  $region53: #{tpu_custom_call.1} parent=0
    _
  %s8 = ssub.s32 1, %s6
  %s9 = scalar_select 0, %s8, %s6
  $region1: #{tpu_custom_call.1} parent=0
    #allocation2 [shape = 'u8[8192]{0}', space=vmem, size = 0x2000, scoped, tag = 'output window, operand 0']
    #allocation3 [shape = 's32[2]{0}', space=sflag, size = 0x8, scoped, tag = 'scoped memory for tpu_custom_call.1']
    #allocation4 [shape = 'u8[8192]{0}', space=vmem, size = 0x2000, scoped, tag = 'output window, operand 1']
    #allocation5 [shape = 's32[2]{0}', space=sflag, size = 0x8, scoped, tag = 'scoped memory for tpu_custom_call.1']
    %10 = vsyncpa [#allocation3], 0
    %s11 = scalar_lea.sflag [#allocation3], 1
    %12 = vsyncpa %s11, 0
    %13 = vsyncpa [#allocation5], 0
    %s14 = scalar_lea.sflag [#allocation5], 1
    %15 = vsyncpa %s14, 0
    loop: start=0, step=1, limit=4
    $region2: #{tpu_custom_call.1} parent=1 // loop_pre_header
      _
    $region3: #{tpu_custom_call.1} parent=1 // loop_header
      %s17 = sphi 0, %s21
      %p18 = scmp.ge.s32.totalorder %s17, 4
      %s27 = sphi 0, %s29
      %s30 = sphi 0, %s27
      %s31 = sphi 0, %s30
      %s47 = sphi 0, %s31
      %s53 = sphi 0, %s55
      %s56 = sphi 0, %s53
      %s57 = sphi 0, %s56
      %s73 = sphi 0, %s57
      %s79 = sphi 0, %s81
      %s82 = sphi 0, %s79
      %s83 = sphi 0, %s82
      %s99 = sphi 0, %s83
      %s105 = sphi 0, %s107
      %s108 = sphi 0, %s105
      %s109 = sphi 0, %s108
      %s125 = sphi 0, %s109
      %s131 = sphi 0, %s133
      %s134 = sphi 0, %s131
      %s135 = sphi 0, %s134
      %s151 = sphi 0, %s135
    $region4: #{tpu_custom_call.1} parent=1 // loop_header_branch
      %20 = sbr.rel (%p18) target = $region8
    $region5: #{tpu_custom_call.1} parent=1 // loop_body
      %s22 = ssub.s32 %s17, 1
      %s23 = ssub.s32 %s17, 2
      %s24 = sadd.s32 %s17, 1
      %s25 = ssub.s32 %s17, %s24
      %p26 = scmp.eq.s32.totalorder %s25, 0
      %s28 = sadd.s32 %s27, 1
      %s29 = scalar_select %p26, %s27, %s28
      %p32 = pneg %p26
      %p33 = scmp.eq.s32.totalorder %s17, 1
      %p34 = por %p32, %p33
      %p35 = scmp.ne.s32.totalorder %s27, %s30
      %p36 = scmp.eq.s32.totalorder %s17, 0
      %p37 = por %p35, %p36
      %p38 = scmp.ne.s32.totalorder %s27, %s30
      %p39 = scmp.eq.s32.totalorder %s22, 1
      %p40 = por %p38, %p39
      %p41 = scmp.ne.s32.totalorder %s30, %s31
      %p42 = scmp.eq.s32.totalorder %s22, 0
      %p43 = por %p41, %p42
      %p44 = scmp.ne.s32.totalorder %s30, %s31
      %p45 = scmp.eq.s32.totalorder %s23, 1
      %p46 = por %p44, %p45
      %p48 = scmp.ne.s32.totalorder %s31, %s47
      %p49 = scmp.eq.s32.totalorder %s23, 0
      %p50 = por %p48, %p49
      %s51 = ssub.s32 %s17, %s24
      %p52 = scmp.eq.s32.totalorder %s51, 0
      %s54 = sadd.s32 %s53, 1
      %s55 = scalar_select %p52, %s53, %s54
      %p58 = pneg %p52
      %p59 = scmp.eq.s32.totalorder %s17, 1
      %p60 = por %p58, %p59
      %p61 = scmp.ne.s32.totalorder %s53, %s56
      %p62 = scmp.eq.s32.totalorder %s17, 0
      %p63 = por %p61, %p62
      %p64 = scmp.ne.s32.totalorder %s53, %s56
      %p65 = scmp.eq.s32.totalorder %s22, 1
      %p66 = por %p64, %p65
      %p67 = scmp.ne.s32.totalorder %s56, %s57
      %p68 = scmp.eq.s32.totalorder %s22, 0
      %p69 = por %p67, %p68
      %p70 = scmp.ne.s32.totalorder %s56, %s57
      %p71 = scmp.eq.s32.totalorder %s23, 1
      %p72 = por %p70, %p71
      %p74 = scmp.ne.s32.totalorder %s57, %s73
      %p75 = scmp.eq.s32.totalorder %s23, 0
      %p76 = por %p74, %p75
      %s77 = ssub.s32 %s17, %s24
      %p78 = scmp.eq.s32.totalorder %s77, 0
      %s80 = sadd.s32 %s79, 1
      %s81 = scalar_select %p78, %s79, %s80
      %p84 = pneg %p78
      %p85 = scmp.eq.s32.totalorder %s17, 1
      %p86 = por %p84, %p85
      %p87 = scmp.ne.s32.totalorder %s79, %s82
      %p88 = scmp.eq.s32.totalorder %s17, 0
      %p89 = por %p87, %p88
      %p90 = scmp.ne.s32.totalorder %s79, %s82
      %p91 = scmp.eq.s32.totalorder %s22, 1
      %p92 = por %p90, %p91
      %p93 = scmp.ne.s32.totalorder %s82, %s83
      %p94 = scmp.eq.s32.totalorder %s22, 0
      %p95 = por %p93, %p94
      %p96 = scmp.ne.s32.totalorder %s82, %s83
      %p97 = scmp.eq.s32.totalorder %s23, 1
      %p98 = por %p96, %p97
      %p100 = scmp.ne.s32.totalorder %s83, %s99
      %p101 = scmp.eq.s32.totalorder %s23, 0
      %p102 = por %p100, %p101
      %s103 = ssub.s32 %s17, %s24
      %p104 = scmp.eq.s32.totalorder %s103, 0
      %s106 = sadd.s32 %s105, 1
      %s107 = scalar_select %p104, %s105, %s106
      %p110 = pneg %p104
      %p111 = scmp.eq.s32.totalorder %s17, 1
      %p112 = por %p110, %p111
      %p113 = scmp.ne.s32.totalorder %s105, %s108
      %p114 = scmp.eq.s32.totalorder %s17, 0
      %p115 = por %p113, %p114
      %p116 = scmp.ne.s32.totalorder %s105, %s108
      %p117 = scmp.eq.s32.totalorder %s22, 1
      %p118 = por %p116, %p117
      %p119 = scmp.ne.s32.totalorder %s108, %s109
      %p120 = scmp.eq.s32.totalorder %s22, 0
      %p121 = por %p119, %p120
      %p122 = scmp.ne.s32.totalorder %s108, %s109
      %p123 = scmp.eq.s32.totalorder %s23, 1
      %p124 = por %p122, %p123
      %p126 = scmp.ne.s32.totalorder %s109, %s125
      %p127 = scmp.eq.s32.totalorder %s23, 0
      %p128 = por %p126, %p127
      %s129 = ssub.s32 %s17, %s24
      %p130 = scmp.eq.s32.totalorder %s129, 0
      %s132 = sadd.s32 %s131, 1
      %s133 = scalar_select %p130, %s131, %s132
      %p136 = pneg %p130
      %p137 = scmp.eq.s32.totalorder %s17, 1
      %p138 = por %p136, %p137
      %p139 = scmp.ne.s32.totalorder %s131, %s134
      %p140 = scmp.eq.s32.totalorder %s17, 0
      %p141 = por %p139, %p140
      %p142 = scmp.ne.s32.totalorder %s131, %s134
      %p143 = scmp.eq.s32.totalorder %s22, 1
      %p144 = por %p142, %p143
      %p145 = scmp.ne.s32.totalorder %s134, %s135
      %p146 = scmp.eq.s32.totalorder %s22, 0
      %p147 = por %p145, %p146
      %p148 = scmp.ne.s32.totalorder %s134, %s135
      %p149 = scmp.eq.s32.totalorder %s23, 1
      %p150 = por %p148, %p149
      %p152 = scmp.ne.s32.totalorder %s135, %s151
      %p153 = scmp.eq.s32.totalorder %s23, 0
      %p154 = por %p152, %p153
      %p155 = scmp.le.s32.totalorder 1, %s17
      %p156 = scmp.lt.s32.totalorder %s17, 3
      %p157 = pnand %p155, %p156
      %p158 = pneg %p157
      // Predicated region
      $region9: #{tpu_custom_call.1} parent=5 // pred_check
        _
      $region10: #{tpu_custom_call.1} parent=5 // pred_check_branch
        %160 = sbr.rel (%p157) target = $region12
      $region11: #{tpu_custom_call.1} parent=5 // pred_region
        %s161 = ssub.s32 %s17, 1
      $region12: #{tpu_custom_call.1} parent=5 // pred_fallthru
        _
      %p162 = scmp.lt.s32.totalorder %s17, 2
      // Predicated region
      $region13: #{tpu_custom_call.1} parent=5 // pred_check
        %p163 = pneg %p162
      $region14: #{tpu_custom_call.1} parent=5 // pred_check_branch
        %165 = sbr.rel (%p163) target = $region16
      $region15: #{tpu_custom_call.1} parent=5 // pred_region
        // Predicated region
        $region17: #{tpu_custom_call.1} parent=15 // pred_check
          %p166 = pneg %p37
        $region18: #{tpu_custom_call.1} parent=15 // pred_check_branch
          %168 = sbr.rel (%p166) target = $region20
        $region19: #{tpu_custom_call.1} parent=15 // pred_region
          %p169 = scmp.lt.s32.totalorder %s17, 1
          %s170 = scalar_select %p169, %s17, 1
          %s171 = smul.addr %s170, 8
          %s172 = scalar_lea.vmem %s0, %s171
        $region20: #{tpu_custom_call.1} parent=15 // pred_fallthru
          _
        // Predicated region
        $region21: #{tpu_custom_call.1} parent=15 // pred_check
          %p173 = pneg %p63
        $region22: #{tpu_custom_call.1} parent=15 // pred_check_branch
          %175 = sbr.rel (%p173) target = $region24
        $region23: #{tpu_custom_call.1} parent=15 // pred_region
          %p176 = scmp.lt.s32.totalorder %s17, 1
          %s177 = scalar_select %p176, %s17, 1
          %s178 = smul.addr %s177, 8
          %s179 = scalar_lea.vmem %s1, %s178
        $region24: #{tpu_custom_call.1} parent=15 // pred_fallthru
          _
        // Predicated region
        $region25: #{tpu_custom_call.1} parent=15 // pred_check
          %p180 = pneg %p89
        $region26: #{tpu_custom_call.1} parent=15 // pred_check_branch
          %182 = sbr.rel (%p180) target = $region28
        $region27: #{tpu_custom_call.1} parent=15 // pred_region
          %p183 = scmp.lt.s32.totalorder %s17, 1
          %s184 = scalar_select %p183, %s17, 1
          %s185 = smul.addr %s184, 8
          %s186 = scalar_lea.vmem %s2, %s185
        $region28: #{tpu_custom_call.1} parent=15 // pred_fallthru
          _
      $region16: #{tpu_custom_call.1} parent=5 // pred_fallthru
        _
      %p187 = scmp.le.s32.totalorder 1, %s17
      %p188 = scmp.lt.s32.totalorder %s17, 3
      %p189 = pnand %p187, %p188
      %p190 = pneg %p189
      // Predicated region
      $region29: #{tpu_custom_call.1} parent=5 // pred_check
        _
      $region30: #{tpu_custom_call.1} parent=5 // pred_check_branch
        %192 = sbr.rel (%p189) target = $region32
      $region31: #{tpu_custom_call.1} parent=5 // pred_region
        %s193 = ssub.s32 %s17, 1
        %p194 = scmp.lt.s32.totalorder %s22, 1
        %s195 = scalar_select %p194, %s22, 1
        %s196 = smul.addr %s195, 8
        %s197 = scalar_lea.vmem %s0, %s196
        %p198 = pneg %p43
        %p199 = pneg %p40
        %p200 = scmp.lt.s32.totalorder %s22, 1
        %s201 = scalar_select %p200, %s22, 1
        %s202 = smul.addr %s201, 8
        %s203 = scalar_lea.vmem %s1, %s202
        %p204 = pneg %p69
        %p205 = pneg %p66
        %p206 = scmp.lt.s32.totalorder %s22, 1
        %s207 = scalar_select %p206, %s22, 1
        %s208 = smul.addr %s207, 8
        %s209 = scalar_lea.vmem %s2, %s208
        %p210 = pneg %p95
        %p211 = pneg %p92
        %p212 = pneg %p121
        %p213 = pneg %p118
        %s214 = sand.u32 %s108, 1
        %s215 = scalar_lea.sflag [#allocation3], %s214
        %s216 = sand.u32 %s108, 1
        %s217 = smul.addr %s216, 8
        %s218 = scalar_lea.vmem [#allocation2], %s217
        %p219 = pneg %p147
        %p220 = pneg %p144
        %s221 = sand.u32 %s134, 1
        %s222 = scalar_lea.sflag [#allocation5], %s221
        %s223 = sand.u32 %s134, 1
        %s224 = smul.addr %s223, 8
        %s225 = scalar_lea.vmem [#allocation4], %s224
        %p226 = scmp.lt.s32.totalorder %s22, 1
        %s227 = scalar_select %p226, %s22, 1
        %s228 = smul.addr %s227, 8
        %s229 = scalar_lea.vmem %s0, %s228
        %p230 = scmp.lt.s32.totalorder %s22, 1
        %s231 = scalar_select %p230, %s22, 1
        %s232 = smul.addr %s231, 8
        %s233 = scalar_lea.vmem %s1, %s232
        %p234 = scmp.lt.s32.totalorder %s22, 1
        %s235 = scalar_select %p234, %s22, 1
        %s236 = smul.addr %s235, 8
        %s237 = scalar_lea.vmem %s2, %s236
        %v238 = vld [vmem:[%s229] sm:$0xff]
        %v239 = vld [vmem:[%s233] sm:$0xff]
        %v240 = vld [vmem:[%s237] sm:$0xff]
        %v241 = vlaneseq
        %v242 = vshrl.u32 %v241, 7
        %s243 = smul.u32 %s22, 8
        %v244 = vstv %s243
        %v245 = vadd.s32 %v242, %v244
        %vm246 = vcmp.lt.s32.totalorder %v245, 12
        %vm247 = vcmask 31744
        %v248 = vsel %vm247, %v238, -inf
        %249 = vmax.xlane.f32.xlu0 %v248
        %v250 = vpop.xlane.xlu0 %249
        %v251 = vsub.f32 %v238, %v250
        %v252 = vmul.f32 %v251, 1.442695
        %v253 = vpow.pop %v252
        %v254 = vsel %vm247, %v253, 0.0
        %255 = vadd.xlane.f32.xlu0 %v254
        %v256 = vpop.xlane.xlu0 %255
        %v257 = vlog2.pop %v256
        %v258 = vmul.f32 %v257, 0.6931472
        %v259 = vadd.f32 %v250, %v258
        %v260 = vlaneseq
        %v261 = vand.u32 %v260, 127
        %262 = vset.pattern.permute.xlu0 0
        %263 = vperm.xlu0 %262, %v239
        %v264 = vpop.permute.xlu0 %263
        %vm265 = vcmp.eq.s32.totalorder %v261, %v264
        %v266 = vsel %vm265, %v238, 0.0
        %v267 = vsel %vm247, %v266, 0.0
        %268 = vadd.xlane.f32.xlu0 %v267
        %v269 = vpop.xlane.xlu0 %268
        %v270 = vsub.f32 %v259, %v269
        %v271 = vmul.f32 %v240, %v270
        %v272 = vsel %vm246, %v271, 0.0
        %v273 = vsel %vm246, %v240, 0.0
        %vm274 = vcmask 7168
        %v275 = vsel %vm274, %v272, 0.0
        %276 = vadd.xlane.f32.xlu0 %v275
        %v277 = vpop.xlane.xlu0 %276
        %v278 = vrot.slane %v277, 4
        %v279 = vadd.f32 %v277, %v278
        %v280 = vrot.slane %v279, 2
        %v281 = vadd.f32 %v279, %v280
        %v282 = vrot.slane %v281, 1
        %v283 = vadd.f32 %v281, %v282
        %s284 = vtos %v283
        %v285 = vsel %vm274, %v273, 0.0
        %286 = vadd.xlane.f32.xlu0 %v285
        %v287 = vpop.xlane.xlu0 %286
        %v288 = vrot.slane %v287, 4
        %v289 = vadd.f32 %v287, %v288
        %v290 = vrot.slane %v289, 2
        %v291 = vadd.f32 %v289, %v290
        %v292 = vrot.slane %v291, 1
        %v293 = vadd.f32 %v291, %v292
        %s294 = vtos %v293
        %v295 = vstv %s284
        %296 = vst [vmem:[%s218] sm:$0xff] %v295
        %v297 = vstv %s294
        %298 = vst [vmem:[%s225] sm:$0xff] %v297
        %s299 = sand.u32 %s108, 1
        %s300 = scalar_lea.sflag [#allocation3], %s299
        %s301 = sand.u32 %s108, 1
        %s302 = smul.addr %s301, 8
        %s303 = scalar_lea.vmem [#allocation2], %s302
        %s304 = sand.u32 %s134, 1
        %s305 = scalar_lea.sflag [#allocation5], %s304
        %s306 = sand.u32 %s134, 1
        %s307 = smul.addr %s306, 8
        %s308 = scalar_lea.vmem [#allocation4], %s307
        // Predicated region
        $region33: #{tpu_custom_call.1} parent=31 // pred_check
          %p309 = pneg %p118
        $region34: #{tpu_custom_call.1} parent=31 // pred_check_branch
          %311 = sbr.rel (%p309) target = $region36
        $region35: #{tpu_custom_call.1} parent=31 // pred_region
          %313 = vsyncadd %s300, 0
          %s314 = smul.addr %s22, 8
          %s315 = scalar_lea.hbm %s3, %s314
          %s317 = sshll.u32 %s303, 4
          %s318 = int_to_ptr.vmem [resolvable:$true] %s317
          %s319 = sshll.u32 %s315, 4
          %s320 = int_to_ptr.hbm [resolvable:$true] %s319
          %322 = dma.vmem_to_hbm [thread:$0]  %s318, 128, %s320, %s300
        $region36: #{tpu_custom_call.1} parent=31 // pred_fallthru
          _
        // Predicated region
        $region37: #{tpu_custom_call.1} parent=31 // pred_check
          %p323 = pneg %p144
        $region38: #{tpu_custom_call.1} parent=31 // pred_check_branch
          %325 = sbr.rel (%p323) target = $region40
        $region39: #{tpu_custom_call.1} parent=31 // pred_region
          %327 = vsyncadd %s305, 0
          %s328 = smul.addr %s22, 8
          %s329 = scalar_lea.hbm %s4, %s328
          %s331 = sshll.u32 %s308, 4
          %s332 = int_to_ptr.vmem [resolvable:$true] %s331
          %s333 = sshll.u32 %s329, 4
          %s334 = int_to_ptr.hbm [resolvable:$true] %s333
          %336 = dma.vmem_to_hbm [thread:$0]  %s332, 128, %s334, %s305
        $region40: #{tpu_custom_call.1} parent=31 // pred_fallthru
          _
      $region32: #{tpu_custom_call.1} parent=5 // pred_fallthru
        _
      %p337 = scmp.le.s32.totalorder 2, %s17
      // Predicated region
      $region41: #{tpu_custom_call.1} parent=5 // pred_check
        %p338 = pneg %p337
      $region42: #{tpu_custom_call.1} parent=5 // pred_check_branch
        %340 = sbr.rel (%p338) target = $region44
      $region43: #{tpu_custom_call.1} parent=5 // pred_region
        %s341 = ssub.s32 %s17, 2
        // Predicated region
        $region45: #{tpu_custom_call.1} parent=43 // pred_check
          %p342 = pneg %p124
        $region46: #{tpu_custom_call.1} parent=43 // pred_check_branch
          %344 = sbr.rel (%p342) target = $region48
        $region47: #{tpu_custom_call.1} parent=43 // pred_region
          %s345 = sand.u32 %s109, 1
          %s346 = scalar_lea.sflag [#allocation3], %s345
          %s347 = sand.u32 %s109, 1
          %s348 = smul.addr %s347, 8
          %s349 = scalar_lea.vmem [#allocation2], %s348
          %351 = dma.done %s346, 128
        $region48: #{tpu_custom_call.1} parent=43 // pred_fallthru
          _
        // Predicated region
        $region49: #{tpu_custom_call.1} parent=43 // pred_check
          %p352 = pneg %p150
        $region50: #{tpu_custom_call.1} parent=43 // pred_check_branch
          %354 = sbr.rel (%p352) target = $region52
        $region51: #{tpu_custom_call.1} parent=43 // pred_region
          %s355 = sand.u32 %s135, 1
          %s356 = scalar_lea.sflag [#allocation5], %s355
          %s357 = sand.u32 %s135, 1
          %s358 = smul.addr %s357, 8
          %s359 = scalar_lea.vmem [#allocation4], %s358
          %361 = dma.done %s356, 128
        $region52: #{tpu_custom_call.1} parent=43 // pred_fallthru
          _
      $region44: #{tpu_custom_call.1} parent=5 // pred_fallthru
        _
    $region6: #{tpu_custom_call.1} parent=1 // loop_footer
      %s21 = sadd.s32 1, %s17
    $region7: #{tpu_custom_call.1} parent=1 // loop_footer_branch
      %16 = sbr.rel target = $region3
    $region8: #{tpu_custom_call.1} parent=1 // loop_exit
      _
    %362 = vsyncpa [#allocation3], 1
    %s363 = scalar_lea.sflag [#allocation3], 1
    %364 = vsyncpa %s363, 1
    %365 = vsyncpa [#allocation5], 1
    %s366 = scalar_lea.sflag [#allocation5], 1
    %367 = vsyncpa %s366, 1

</llo_original>
